<compile_context>
chip_gen: v6e
topology: v6e:2x2x1
jax: 0.10.0
libtpu: 0.0.40
codegen_flags: <defaults>
</compile_context>

<pallas_src>
import functools

import jax
import jax.numpy as jnp
from jax.experimental import pallas as pl
from jax.experimental.pallas import tpu as pltpu


def _coupling_kernel(x_ref, w1_ref, b1_ref, w2_ref, b2_ref,
                     y_ref, scale_ref, *, F):
    x = x_ref[...].astype(jnp.float32)

    # Fused first layer of both branches, directly on un-permuted x:
    # (TB, F) @ (F, 2*hidden).  Rows of w1 at x_b columns are zero.
    h = jnp.dot(x, w1_ref[...], preferred_element_type=jnp.float32) + b1_ref[...]
    h = jnp.maximum(h, 0.0)

    # Fused second layer: (TB, 2*hidden) @ (2*hidden, 2F + d).
    st = jnp.dot(h, w2_ref[...], preferred_element_type=jnp.float32) + b2_ref[...]

    scale_full = jnp.tanh(st[:, :F])          # original order; 0 at x_a cols
    translate_full = st[:, F:2 * F]           # original order; 0 at x_a cols
    scale_compact = jnp.tanh(st[:, 2 * F:])   # shuffled order (module output)

    # y = x for x_a columns (exp(0)=1, t=0), affine update for x_b columns.
    y_ref[...] = (x * jnp.exp(scale_full) + translate_full).astype(y_ref.dtype)
    scale_ref[...] = scale_compact.astype(scale_ref.dtype)


def init_params(key, in_features, hidden=128, dtype=jnp.float32):
    """Deterministic init matching the module's parameter shapes.

    Weights returned in (in, out) layout (already transposed), biases (1, out).
    """
    d = in_features // 2
    ks = jax.random.split(key, 8)

    def lin(kw, kb, fan_in, fan_out):
        bound = 1.0 / jnp.sqrt(fan_in)
        w = jax.random.uniform(kw, (fan_in, fan_out), dtype, -bound, bound)
        b = jax.random.uniform(kb, (1, fan_out), dtype, -bound, bound)
        return w, b

    w1s, b1s = lin(ks[0], ks[1], d, hidden)
    w2s, b2s = lin(ks[2], ks[3], hidden, d)
    w1t, b1t = lin(ks[4], ks[5], d, hidden)
    w2t, b2t = lin(ks[6], ks[7], hidden, d)
    return (w1s, b1s, w2s, b2s, w1t, b1t, w2t, b2t)


def pack_params(params, perm, hidden=128):
    """Fold the feature permutation + branch fusion into the weights (offline, once)."""
    (w1s, b1s, w2s, b2s, w1t, b1t, w2t, b2t) = params
    d = w1s.shape[0]
    F = 2 * d
    dtype = w1s.dtype
    pa = perm[:d]        # original columns forming x_a (conditioning half)
    pb = perm[d:]        # original columns forming x_b (transformed half)

    # First layer, scattered so it consumes un-permuted x: (F, 2*hidden).
    w1 = jnp.zeros((F, 2 * hidden), dtype)
    w1 = w1.at[pa, :hidden].set(w1s)
    w1 = w1.at[pa, hidden:].set(w1t)
    b1 = jnp.concatenate([b1s, b1t], axis=1)                   # (1, 2*hidden)

    # Second layer: (2*hidden, 2F + d).
    nw = 2 * F + d
    w2 = jnp.zeros((2 * hidden, nw), dtype)
    b2 = jnp.zeros((1, nw), dtype)
    # scale pre-activation scattered to original x_b columns (rows 0:hidden)
    w2 = w2.at[:hidden, pb].set(w2s)
    b2 = b2.at[:, pb].set(b2s)
    # translate scattered to original x_b columns, offset by F (rows hidden:2h)
    w2 = w2.at[hidden:, F + pb].set(w2t)
    b2 = b2.at[:, F + pb].set(b2t)
    # compact scale (shuffled order) for the module's second return value
    w2 = w2.at[:hidden, 2 * F:].set(w2s)
    b2 = b2.at[:, 2 * F:].set(b2s)
    return (w1, b1, w2, b2)


def _pick_block_batch(B, F, d, itemsize):
    """Batch tile sized to ~12 MiB of double-buffered activations (x + y + scale)."""
    per_row = (2 * F + d) * itemsize * 2
    tb = int(min(4096, max(8, (12 << 20) // max(per_row, 1))))
    tb = min(tb, B)
    if B >= 512:
        tb = min(tb, pl.cdiv(B, 2))      # >= 2 grid blocks -> both v7x TCs busy
    if B >= 8:
        tb = max(8, (tb // 8) * 8)       # sublane-aligned tile
    else:
        tb = B
    return tb


def additive_coupling_forward(x, packed_params, block_batch=None):
    """Forward pass. Returns (y, scale); perm/inv_perm are baked into packed_params."""
    B, F = x.shape
    d = F // 2
    w1, b1, w2, b2 = packed_params
    hidden2 = w1.shape[1]                # 2 * hidden

    itemsize = jnp.dtype(x.dtype).itemsize
    TB = block_batch if block_batch is not None else _pick_block_batch(B, F, d, itemsize)
    TB = min(TB, B)
    grid = (pl.cdiv(B, TB),)

    weight_bytes = sum(int(a.size) * jnp.dtype(a.dtype).itemsize for a in packed_params)
    hidden = hidden2 // 2
    cost = pl.CostEstimate(
        flops=int(8 * B * d * hidden + 4 * B * F),       # real (non-zero-block) work
        transcendentals=int(2 * B * d),                  # tanh + exp on the live half
        bytes_accessed=int((2 * B * F + B * d) * itemsize + weight_bytes),
    )

    kernel = functools.partial(_coupling_kernel, F=F)

    y, scale = pl.pallas_call(
        kernel,
        out_shape=(jax.ShapeDtypeStruct((B, F), x.dtype),
                   jax.ShapeDtypeStruct((B, d), x.dtype)),
        grid=grid,
        in_specs=[
            pl.BlockSpec((TB, F), lambda i: (i, 0)),     # x, batch-tiled
            pl.BlockSpec(w1.shape, lambda i: (0, 0)),    # fused weights: VMEM-resident
            pl.BlockSpec(b1.shape, lambda i: (0, 0)),
            pl.BlockSpec(w2.shape, lambda i: (0, 0)),
            pl.BlockSpec(b2.shape, lambda i: (0, 0)),
        ],
        out_specs=(pl.BlockSpec((TB, F), lambda i: (i, 0)),
                   pl.BlockSpec((TB, d), lambda i: (i, 0))),
        compiler_params=pltpu.CompilerParams(
            dimension_semantics=("parallel",),           # megacore split on v7x
            vmem_limit_bytes=32 * 1024 * 1024),          # safe on v5e/v6e/v7x
        cost_estimate=cost,
    )(x, w1, b1, w2, b2)
    return y, scale


def _reference_forward(x, params, perm):
    """Pure-JAX reference with explicit shuffle/unshuffle (original module semantics)."""
    (w1s, b1s, w2s, b2s, w1t, b1t, w2t, b2t) = params
    d = x.shape[1] // 2
    xs = x[:, perm]
    x_a, x_b = xs[:, :d], xs[:, d:]
    scale = jnp.tanh(jnp.maximum(x_a @ w1s + b1s, 0.0) @ w2s + b2s)
    translate = jnp.maximum(x_a @ w1t + b1t, 0.0) @ w2t + b2t
    x_b = x_b * jnp.exp(scale) + translate
    y = jnp.concatenate([x_a, x_b], axis=1)[:, jnp.argsort(perm)]
    return y, scale


if __name__ == "__main__":
    key = jax.random.PRNGKey(0)
    k_x, k_p, k_perm = jax.random.split(key, 3)

    batch = 8
    in_features = 8          # must be even (split into two halves)
    hidden = 128             # fixed by the module definition

    x = jax.random.normal(k_x, (batch, in_features), dtype=jnp.float32)
    params = init_params(k_p, in_features, hidden)

    # One deterministic permutation, baked into the packed weights offline.
    perm = jax.random.permutation(k_perm, in_features)
    packed = pack_params(params, perm, hidden)

    y, scale = additive_coupling_forward(x, packed)
    y, scale = jax.block_until_ready((y, scale))

    y_ref, scale_ref = _reference_forward(x, params, perm)
    assert jnp.allclose(y, y_ref, atol=1e-5, rtol=1e-5), "y mismatch"
    assert jnp.allclose(scale, scale_ref, atol=1e-5, rtol=1e-5), "scale mismatch"

    print("KERNEL_OK")
</pallas_src>

<mosaic_0001>
module attributes {stable_mosaic.version = 11 : i64} {
  func.func @_coupling_kernel(%arg0: i32, %arg1: memref<8x8xf32, #tpu.memory_space<vmem>>, %arg2: memref<8x256xf32, #tpu.memory_space<vmem>>, %arg3: memref<1x256xf32, #tpu.memory_space<vmem>>, %arg4: memref<256x20xf32, #tpu.memory_space<vmem>>, %arg5: memref<1x20xf32, #tpu.memory_space<vmem>>, %arg6: memref<8x8xf32, #tpu.memory_space<vmem>>, %arg7: memref<8x4xf32, #tpu.memory_space<vmem>>) attributes {dimension_semantics = [#tpu.dimension_semantics<parallel>], iteration_bounds = array<i64: 1>, scalar_prefetch = 0 : i64, scratch_operands = 0 : i64, tpu.core_type = #tpu.core_type<tc>, window_params = [{transform_indices = @transform_0, window_bounds = array<i64: 8, 8>}, {pipeline_mode = #tpu.pipeline_mode<synchronous>, transform_indices = @transform_1, window_bounds = array<i64: 8, 256>}, {pipeline_mode = #tpu.pipeline_mode<synchronous>, transform_indices = @transform_2, window_bounds = array<i64: 1, 256>}, {pipeline_mode = #tpu.pipeline_mode<synchronous>, transform_indices = @transform_3, window_bounds = array<i64: 256, 20>}, {pipeline_mode = #tpu.pipeline_mode<synchronous>, transform_indices = @transform_4, window_bounds = array<i64: 1, 20>}, {transform_indices = @transform_5, window_bounds = array<i64: 8, 8>}, {transform_indices = @transform_6, window_bounds = array<i64: 8, 4>}]} {
    %c0 = arith.constant 0 : index
    %c0_0 = arith.constant 0 : index
    %0 = vector.load %arg1[%c0, %c0_0] : memref<8x8xf32, #tpu.memory_space<vmem>>, vector<8x8xf32>
    %c0_1 = arith.constant 0 : index
    %c0_2 = arith.constant 0 : index
    %1 = vector.load %arg2[%c0_1, %c0_2] : memref<8x256xf32, #tpu.memory_space<vmem>>, vector<8x256xf32>
    %cst = arith.constant dense<0.000000e+00> : vector<8x256xf32>
    %2 = tpu.matmul %0, %1, %cst {dimension_numbers = #tpu.dot_dimension_numbers<[1], [0], [0], [1], [0, 0, 1, 1], [], []>} : vector<8x8xf32>, vector<8x256xf32>, vector<8x256xf32> -> vector<8x256xf32>
    %c0_3 = arith.constant 0 : index
    %c0_4 = arith.constant 0 : index
    %3 = vector.load %arg3[%c0_3, %c0_4] : memref<1x256xf32, #tpu.memory_space<vmem>>, vector<1x256xf32>
    %4 = vector.broadcast %3 : vector<1x256xf32> to vector<8x256xf32>
    %5 = arith.addf %2, %4 : vector<8x256xf32>
    %cst_5 = arith.constant 0.000000e+00 : f32
    %6 = vector.broadcast %cst_5 : f32 to vector<8x256xf32>
    %7 = arith.maximumf %5, %6 : vector<8x256xf32>
    %c0_6 = arith.constant 0 : index
    %c0_7 = arith.constant 0 : index
    %8 = vector.load %arg4[%c0_6, %c0_7] : memref<256x20xf32, #tpu.memory_space<vmem>>, vector<256x20xf32>
    %cst_8 = arith.constant dense<0.000000e+00> : vector<8x20xf32>
    %9 = tpu.matmul %7, %8, %cst_8 {dimension_numbers = #tpu.dot_dimension_numbers<[1], [0], [0], [1], [0, 0, 1, 1], [], []>} : vector<8x256xf32>, vector<256x20xf32>, vector<8x20xf32> -> vector<8x20xf32>
    %c0_9 = arith.constant 0 : index
    %c0_10 = arith.constant 0 : index
    %10 = vector.load %arg5[%c0_9, %c0_10] : memref<1x20xf32, #tpu.memory_space<vmem>>, vector<1x20xf32>
    %11 = vector.broadcast %10 : vector<1x20xf32> to vector<8x20xf32>
    %12 = arith.addf %9, %11 : vector<8x20xf32>
    %13 = vector.extract_strided_slice %12 {offsets = [0, 0], sizes = [8, 8], strides = [1, 1]} : vector<8x20xf32> to vector<8x8xf32>
    %14 = math.tanh %13 : vector<8x8xf32>
    %15 = vector.extract_strided_slice %12 {offsets = [0, 8], sizes = [8, 8], strides = [1, 1]} : vector<8x20xf32> to vector<8x8xf32>
    %16 = vector.extract_strided_slice %12 {offsets = [0, 16], sizes = [8, 4], strides = [1, 1]} : vector<8x20xf32> to vector<8x4xf32>
    %17 = math.tanh %16 : vector<8x4xf32>
    %18 = math.exp %14 : vector<8x8xf32>
    %19 = arith.mulf %0, %18 : vector<8x8xf32>
    %20 = arith.addf %19, %15 : vector<8x8xf32>
    %c0_11 = arith.constant 0 : index
    %c0_12 = arith.constant 0 : index
    %21 = vector.load %arg6[%c0_11, %c0_12] : memref<8x8xf32, #tpu.memory_space<vmem>>, vector<8x8xf32>
    tpu.vector_store %arg6[%c0_11, %c0_12], %20 {strides = array<i32>} : memref<8x8xf32, #tpu.memory_space<vmem>>, vector<8x8xf32>,
    %c0_13 = arith.constant 0 : index
    %c0_14 = arith.constant 0 : index
    %22 = vector.load %arg7[%c0_13, %c0_14] : memref<8x4xf32, #tpu.memory_space<vmem>>, vector<8x4xf32>
    tpu.vector_store %arg7[%c0_13, %c0_14], %17 {strides = array<i32>} : memref<8x4xf32, #tpu.memory_space<vmem>>, vector<8x4xf32>,
    return
  }
  func.func @transform_0(%arg0: i32) -> (i32, i32) {
    %c0_i32 = arith.constant 0 : i32
    %c0_i32_0 = arith.constant 0 : i32
    return %arg0, %c0_i32 : i32, i32
  }
  func.func @transform_1(%arg0: i32) -> (i32, i32) {
    %c0_i32 = arith.constant 0 : i32
    %c0_i32_0 = arith.constant 0 : i32
    %c0_i32_1 = arith.constant 0 : i32
    return %c0_i32, %c0_i32_0 : i32, i32
  }
  func.func @transform_2(%arg0: i32) -> (i32, i32) {
    %c0_i32 = arith.constant 0 : i32
    %c0_i32_0 = arith.constant 0 : i32
    %c0_i32_1 = arith.constant 0 : i32
    return %c0_i32, %c0_i32_0 : i32, i32
  }
  func.func @transform_3(%arg0: i32) -> (i32, i32) {
    %c0_i32 = arith.constant 0 : i32
    %c0_i32_0 = arith.constant 0 : i32
    %c0_i32_1 = arith.constant 0 : i32
    return %c0_i32, %c0_i32_0 : i32, i32
  }
  func.func @transform_4(%arg0: i32) -> (i32, i32) {
    %c0_i32 = arith.constant 0 : i32
    %c0_i32_0 = arith.constant 0 : i32
    %c0_i32_1 = arith.constant 0 : i32
    return %c0_i32, %c0_i32_0 : i32, i32
  }
  func.func @transform_5(%arg0: i32) -> (i32, i32) {
    %c0_i32 = arith.constant 0 : i32
    %c0_i32_0 = arith.constant 0 : i32
    return %arg0, %c0_i32 : i32, i32
  }
  func.func @transform_6(%arg0: i32) -> (i32, i32) {
    %c0_i32 = arith.constant 0 : i32
    %c0_i32_0 = arith.constant 0 : i32
    return %arg0, %c0_i32 : i32, i32
  }
}

</mosaic_0001>

<llo_original>
// kernel: tpu_custom_call.1
$region0: #{tpu_custom_call.1}
  #allocation0 [shape = 'u32[]', space=smem, size = 0x4, offset = 0x4, fixed_abs, tag = 'smem constant byte address 0x4 - core index']
  #allocation1 [shape = 'u32[144,128]{1,0:T(1,128)}', space=vmem, size = 0x12000, scoped, tag = 'internal scratch']
  %s0 = inlined_call_operand.vmem [shape: f32[8,8], index: 0, kind: input, shape index: {}]
  %s1 = inlined_call_operand.vmem [shape: f32[8,256], index: 1, kind: input, shape index: {}]
  %s2 = inlined_call_operand.vmem [shape: f32[1,256], index: 2, kind: input, shape index: {}]
  %s3 = inlined_call_operand.vmem [shape: f32[256,20], index: 3, kind: input, shape index: {}]
  %s4 = inlined_call_operand.vmem [shape: f32[1,20], index: 4, kind: input, shape index: {}]
  %s5 = inlined_call_operand.hbm [shape: f32[8,8], index: 5, kind: output, shape index: {0}]
  %s6 = inlined_call_operand.vmem [shape: f32[8,4], index: 6, kind: output, shape index: {1}]
  %7 = xla_tuple %s5, %s6
  %s8 = sld [smem:[#allocation0]]
  $region38: #{tpu_custom_call.1} parent=0
    _
  %s10 = ssub.s32 1, %s8
  %s11 = scalar_select 0, %s10, %s8
  $region1: #{tpu_custom_call.1} parent=0
    #allocation2 [shape = 'u8[4096]{0}', space=vmem, size = 0x1000, scoped, tag = 'output window, operand 0, single buffered']
    #allocation3 [shape = 's32[1]{0}', space=sflag, size = 0x4, scoped, tag = 'scoped memory for tpu_custom_call.1']
    %12 = vsyncpa [#allocation3], 0
    // Predicated region
    $region2: #{tpu_custom_call.1} parent=1 // pred_check
      _
    $region3: #{tpu_custom_call.1} parent=1 // pred_check_branch
      %14 = sbr.rel (0) target = $region5
    $region4: #{tpu_custom_call.1} parent=1 // pred_region
      _
    $region5: #{tpu_custom_call.1} parent=1 // pred_fallthru
      _
    // Predicated region
    $region6: #{tpu_custom_call.1} parent=1 // pred_check
      _
    $region7: #{tpu_custom_call.1} parent=1 // pred_check_branch
      %16 = sbr.rel (0) target = $region9
    $region8: #{tpu_custom_call.1} parent=1 // pred_region
      _
    $region9: #{tpu_custom_call.1} parent=1 // pred_fallthru
      _
    // Predicated region
    $region10: #{tpu_custom_call.1} parent=1 // pred_check
      _
    $region11: #{tpu_custom_call.1} parent=1 // pred_check_branch
      %18 = sbr.rel (0) target = $region13
    $region12: #{tpu_custom_call.1} parent=1 // pred_region
      _
    $region13: #{tpu_custom_call.1} parent=1 // pred_fallthru
      _
    // Predicated region
    $region14: #{tpu_custom_call.1} parent=1 // pred_check
      _
    $region15: #{tpu_custom_call.1} parent=1 // pred_check_branch
      %20 = sbr.rel (0) target = $region17
    $region16: #{tpu_custom_call.1} parent=1 // pred_region
      _
    $region17: #{tpu_custom_call.1} parent=1 // pred_fallthru
      _
    // Predicated region
    $region18: #{tpu_custom_call.1} parent=1 // pred_check
      _
    $region19: #{tpu_custom_call.1} parent=1 // pred_check_branch
      %22 = sbr.rel (0) target = $region21
    $region20: #{tpu_custom_call.1} parent=1 // pred_region
      _
    $region21: #{tpu_custom_call.1} parent=1 // pred_fallthru
      _
    %v23 = vld [vmem:[%s0] sm:$0xff]
    %v24 = vld [vmem:[%s1] sm:$0xff]
    %v25 = vld [vmem:[%s1 + $0x8] sm:$0xff]
    %v26 = vld [vmem:[%s2] sm:$0x3]
    %v28 = vlaneseq
    %v29 = vshrl.u32 %v28, 7
    %v30 = vsub.s32 0, %v29
    %v31 = vrot.slane %v26, %v30
    %v32 = vlaneseq
    %v33 = vshrl.u32 %v32, 7
    %v34 = vsub.s32 1, %v33
    %v35 = vrot.slane %v26, %v34
    %vm38 = vcmask 64512
    %v40 = vsel %vm38, %v23, 0
    %42 = vmatprep.subr.mxu0 0.0
    %43 = vmatpush1.msra.mxu0 0.0
    %44 = vmatprep.subr.mxu0 0.0
    %45 = vmatpush1.msra.mxu0 0.0
    %46 = vmatprep.subr.mxu0 0.0
    %47 = vmatpush1.msra.mxu0 0.0
    %48 = vmatprep.subr.mxu0 0.0
    %49 = vmatpush1.msra.mxu0 0.0
    %50 = vmatprep.subr.mxu0 0.0
    %51 = vmatpush1.msra.mxu0 0.0
    %52 = vmatprep.subr.mxu0 0.0
    %53 = vmatpush1.msra.mxu0 0.0
    %54 = vmatprep.subr.mxu0 0.0
    %55 = vmatpush1.msra.mxu0 0.0
    %56 = vmatprep.subr.mxu0 0.0
    %57 = vmatpush1.msra.mxu0 0.0
    %58 = vmatprep.subr.mxu0 0.0
    %59 = vmatpush1.msra.mxu0 0.0
    %60 = vmatprep.subr.mxu0 0.0
    %61 = vmatpush1.msra.mxu0 0.0
    %62 = vmatprep.subr.mxu0 0.0
    %63 = vmatpush1.msra.mxu0 0.0
    %64 = vmatprep.subr.mxu0 0.0
    %65 = vmatpush1.msra.mxu0 0.0
    %66 = vmatprep.subr.mxu0 0.0
    %67 = vmatpush1.msra.mxu0 0.0
    %68 = vmatprep.subr.mxu0 0.0
    %69 = vmatpush1.msra.mxu0 0.0
    %70 = vmatprep.subr.mxu0 0.0
    %71 = vmatpush1.msra.mxu0 0.0
    %72 = vmatprep.subr.mxu0 %v25
    %73 = vmatpush1.msra.mxu0 %v24
    %74 = vmatprep.subr.mxu0 0.0
    %75 = vmatpush2.msra.mxu0 0.0
    %76 = vmatprep.subr.mxu0 0.0
    %77 = vmatpush2.msra.mxu0 0.0
    %78 = vmatprep.subr.mxu0 0.0
    %79 = vmatpush2.msra.mxu0 0.0
    %80 = vmatprep.subr.mxu0 0.0
    %81 = vmatpush2.msra.mxu0 0.0
    %82 = vmatprep.subr.mxu0 0.0
    %83 = vmatpush2.msra.mxu0 0.0
    %84 = vmatprep.subr.mxu0 0.0
    %85 = vmatpush2.msra.mxu0 0.0
    %86 = vmatprep.subr.mxu0 0.0
    %87 = vmatpush2.msra.mxu0 0.0
    %88 = vmatprep.subr.mxu0 0.0
    %89 = vmatpush2.msra.mxu0 0.0
    %90 = vmatprep.subr.mxu0 0.0
    %91 = vmatpush2.msra.mxu0 0.0
    %92 = vmatprep.subr.mxu0 0.0
    %93 = vmatpush2.msra.mxu0 0.0
    %94 = vmatprep.subr.mxu0 0.0
    %95 = vmatpush2.msra.mxu0 0.0
    %96 = vmatprep.subr.mxu0 0.0
    %97 = vmatpush2.msra.mxu0 0.0
    %98 = vmatprep.subr.mxu0 0.0
    %99 = vmatpush2.msra.mxu0 0.0
    %100 = vmatprep.subr.mxu0 0.0
    %101 = vmatpush2.msra.mxu0 0.0
    %102 = vmatprep.subr.mxu0 0.0
    %103 = vmatpush2.msra.mxu0 0.0
    %104 = vmatprep.subr.mxu0 0.0
    %105 = vmatpush2.msra.mxu0 0.0
    %106 = vmatprep.mubr.f32.mxu0 0.0
    %107 = vmatmul.mubr.f32.gmra.mxu0 %v40
    %v108 = vpop.f32.mrf.mxu0
    %v109 = vadd.f32 %v31, %v108
    %v110 = vpop.f32.mrf.mxu0
    %v111 = vadd.f32 %v35, %v110
    %112 = vdwg.mxu0
    %v113 = vmax.f32 %v109, 0.0
    %v114 = vmax.f32 %v111, 0.0
    %v115 = vld [vmem:[%s3] sm:$0xff]
    %v116 = vld [vmem:[%s3 + $0x8] sm:$0xff]
    %v117 = vld [vmem:[%s3 + $0x10] sm:$0xff]
    %v118 = vld [vmem:[%s3 + $0x18] sm:$0xff]
    %v119 = vld [vmem:[%s3 + $0x20] sm:$0xff]
    %v120 = vld [vmem:[%s3 + $0x28] sm:$0xff]
    %v121 = vld [vmem:[%s3 + $0x30] sm:$0xff]
    %v122 = vld [vmem:[%s3 + $0x38] sm:$0xff]
    %v123 = vld [vmem:[%s3 + $0x40] sm:$0xff]
    %v124 = vld [vmem:[%s3 + $0x48] sm:$0xff]
    %v125 = vld [vmem:[%s3 + $0x50] sm:$0xff]
    %v126 = vld [vmem:[%s3 + $0x58] sm:$0xff]
    %v127 = vld [vmem:[%s3 + $0x60] sm:$0xff]
    %v128 = vld [vmem:[%s3 + $0x68] sm:$0xff]
    %v129 = vld [vmem:[%s3 + $0x70] sm:$0xff]
    %v130 = vld [vmem:[%s3 + $0x78] sm:$0xff]
    %v131 = vld [vmem:[%s3 + $0x80] sm:$0xff]
    %v132 = vld [vmem:[%s3 + $0x88] sm:$0xff]
    %v133 = vld [vmem:[%s3 + $0x90] sm:$0xff]
    %v134 = vld [vmem:[%s3 + $0x98] sm:$0xff]
    %v135 = vld [vmem:[%s3 + $0xa0] sm:$0xff]
    %v136 = vld [vmem:[%s3 + $0xa8] sm:$0xff]
    %v137 = vld [vmem:[%s3 + $0xb0] sm:$0xff]
    %v138 = vld [vmem:[%s3 + $0xb8] sm:$0xff]
    %v139 = vld [vmem:[%s3 + $0xc0] sm:$0xff]
    %v140 = vld [vmem:[%s3 + $0xc8] sm:$0xff]
    %v141 = vld [vmem:[%s3 + $0xd0] sm:$0xff]
    %v142 = vld [vmem:[%s3 + $0xd8] sm:$0xff]
    %v143 = vld [vmem:[%s3 + $0xe0] sm:$0xff]
    %v144 = vld [vmem:[%s3 + $0xe8] sm:$0xff]
    %v145 = vld [vmem:[%s3 + $0xf0] sm:$0xff]
    %v146 = vld [vmem:[%s3 + $0xf8] sm:$0xff]
    %v147 = vld [vmem:[%s4] sm:$0x1]
    %v149 = vlaneseq
    %v150 = vshrl.u32 %v149, 7
    %v151 = vsub.s32 0, %v150
    %v152 = vrot.slane %v147, %v151
    %154 = vmatprep.subr.mxu0 0.0
    %155 = vmatpush1.msra.mxu0 %v130
    %156 = vmatprep.subr.mxu0 0.0
    %157 = vmatpush1.msra.mxu0 %v129
    %158 = vmatprep.subr.mxu0 0.0
    %159 = vmatpush1.msra.mxu0 %v128
    %160 = vmatprep.subr.mxu0 0.0
    %161 = vmatpush1.msra.mxu0 %v127
    %162 = vmatprep.subr.mxu0 0.0
    %163 = vmatpush1.msra.mxu0 %v126
    %164 = vmatprep.subr.mxu0 0.0
    %165 = vmatpush1.msra.mxu0 %v125
    %166 = vmatprep.subr.mxu0 0.0
    %167 = vmatpush1.msra.mxu0 %v124
    %168 = vmatprep.subr.mxu0 0.0
    %169 = vmatpush1.msra.mxu0 %v123
    %170 = vmatprep.subr.mxu0 0.0
    %171 = vmatpush1.msra.mxu0 %v122
    %172 = vmatprep.subr.mxu0 0.0
    %173 = vmatpush1.msra.mxu0 %v121
    %174 = vmatprep.subr.mxu0 0.0
    %175 = vmatpush1.msra.mxu0 %v120
    %176 = vmatprep.subr.mxu0 0.0
    %177 = vmatpush1.msra.mxu0 %v119
    %178 = vmatprep.subr.mxu0 0.0
    %179 = vmatpush1.msra.mxu0 %v118
    %180 = vmatprep.subr.mxu0 0.0
    %181 = vmatpush1.msra.mxu0 %v117
    %182 = vmatprep.subr.mxu0 0.0
    %183 = vmatpush1.msra.mxu0 %v116
    %184 = vmatprep.subr.mxu0 0.0
    %185 = vmatpush1.msra.mxu0 %v115
    %186 = vmatprep.subr.mxu0 0.0
    %187 = vmatpush2.msra.mxu0 %v146
    %188 = vmatprep.subr.mxu0 0.0
    %189 = vmatpush2.msra.mxu0 %v145
    %190 = vmatprep.subr.mxu0 0.0
    %191 = vmatpush2.msra.mxu0 %v144
    %192 = vmatprep.subr.mxu0 0.0
    %193 = vmatpush2.msra.mxu0 %v143
    %194 = vmatprep.subr.mxu0 0.0
    %195 = vmatpush2.msra.mxu0 %v142
    %196 = vmatprep.subr.mxu0 0.0
    %197 = vmatpush2.msra.mxu0 %v141
    %198 = vmatprep.subr.mxu0 0.0
    %199 = vmatpush2.msra.mxu0 %v140
    %200 = vmatprep.subr.mxu0 0.0
    %201 = vmatpush2.msra.mxu0 %v139
    %202 = vmatprep.subr.mxu0 0.0
    %203 = vmatpush2.msra.mxu0 %v138
    %204 = vmatprep.subr.mxu0 0.0
    %205 = vmatpush2.msra.mxu0 %v137
    %206 = vmatprep.subr.mxu0 0.0
    %207 = vmatpush2.msra.mxu0 %v136
    %208 = vmatprep.subr.mxu0 0.0
    %209 = vmatpush2.msra.mxu0 %v135
    %210 = vmatprep.subr.mxu0 0.0
    %211 = vmatpush2.msra.mxu0 %v134
    %212 = vmatprep.subr.mxu0 0.0
    %213 = vmatpush2.msra.mxu0 %v133
    %214 = vmatprep.subr.mxu0 0.0
    %215 = vmatpush2.msra.mxu0 %v132
    %216 = vmatprep.subr.mxu0 0.0
    %217 = vmatpush2.msra.mxu0 %v131
    %218 = vmatprep.mubr.f32.mxu0 %v114
    %219 = vmatmul.mubr.f32.gmra.mxu0 %v113
    %v220 = vpop.f32.mrf.mxu0
    %v221 = vadd.f32 %v152, %v220
    %v222 = vpop.f32.mrf.mxu0
    %223 = vdwg.mxu0
    %v224 = vtanh.pop %v221
    %v225 = vmul.f32 %v224, 1.442695
    %v226 = vpow.pop %v225
    %v227 = vmul.f32 %v23, %v226
    %229 = vrot.lane.b32.xlu0 %v221, 120
    %v230 = vpop.permute.xlu0 %229
    %v232 = vadd.f32 %v227, %v230
    %233 = vst.msk [vmem:[#allocation2] sm:$0xff] %vm38, %v232
    %235 = vrot.lane.b32.xlu0 %v224, 112
    %v236 = vpop.permute.xlu0 %235
    %vm238 = vcmask 31744
    %239 = vst.msk [vmem:[%s6] sm:$0xff] %vm238, %v236
    // Predicated region
    $region22: #{tpu_custom_call.1} parent=1 // pred_check
      _
    $region23: #{tpu_custom_call.1} parent=1 // pred_check_branch
      %241 = sbr.rel (0) target = $region25
    $region24: #{tpu_custom_call.1} parent=1 // pred_region
      %s243 = ssub.s32 128, 128
      %244 = vsyncadd [#allocation3], %s243
      %s246 = sshll.u32 [#allocation2], 4
      %s247 = int_to_ptr.vmem [resolvable:$true] %s246
      %249 = dma.vmem_to_hbm [thread:$0]  %s247, 128, %s5, [#allocation3]
    $region25: #{tpu_custom_call.1} parent=1 // pred_fallthru
      _
    // Predicated region
    $region26: #{tpu_custom_call.1} parent=1 // pred_check
      _
    $region27: #{tpu_custom_call.1} parent=1 // pred_check_branch
      %251 = sbr.rel (0) target = $region29
    $region28: #{tpu_custom_call.1} parent=1 // pred_region
      _
    $region29: #{tpu_custom_call.1} parent=1 // pred_fallthru
      _
    // Predicated region
    $region30: #{tpu_custom_call.1} parent=1 // pred_check
      _
    $region31: #{tpu_custom_call.1} parent=1 // pred_check_branch
      %253 = sbr.rel (0) target = $region33
    $region32: #{tpu_custom_call.1} parent=1 // pred_region
      %254 = dma.done [#allocation3], 128
    $region33: #{tpu_custom_call.1} parent=1 // pred_fallthru
      _
    // Predicated region
    $region34: #{tpu_custom_call.1} parent=1 // pred_check
      _
    $region35: #{tpu_custom_call.1} parent=1 // pred_check_branch
      %256 = sbr.rel (0) target = $region37
    $region36: #{tpu_custom_call.1} parent=1 // pred_region
      _
    $region37: #{tpu_custom_call.1} parent=1 // pred_fallthru
      _
    %257 = vsyncpa [#allocation3], 1

</llo_original>
